<compile_context>
chip_gen: v7x
topology: tpu7x:2x2x1
jax: 0.10.0
libtpu: 0.0.40
codegen_flags: <defaults>
</compile_context>

<pallas_src>
import jax
import jax.numpy as jnp
from jax.experimental import pallas as pl
from jax.experimental.pallas import tpu as pltpu

PRELU_A = 0.1
W0 = [[-1.0]]
W1 = [[5.0]]
W2 = [[1.0]]

_LANES = 128          # lane-dense last dim (full vreg lane width)
_BLOCK_ROWS = 1024    # (1024, 128) f32 tile = 512 KiB per buffer


def _prelu(z, a):
    return jnp.where(z > 0, z, a * z)


def mlp_kernel(s_ref, x_ref, y_ref):
    # s_ref: SMEM (4,) f32 = [prelu_a, w0, w1, w2] (1x1 Linear weights are scalars,
    #        so each "matmul" is a plain VPU multiply — no MXU involvement).
    # x_ref / y_ref: (tm, 128) lane-dense VMEM tiles.
    a = s_ref[0]
    w0 = s_ref[1]
    w1 = s_ref[2]
    w2 = s_ref[3]
    x = x_ref[...]
    z0 = w0 * x                       # fc0
    g0 = _prelu(z0, a)                # PReLU
    z1 = w1 * g0                      # fc1
    g1 = _prelu(z1, a)                # PReLU
    y_ref[...] = w2 * g1              # fc2 — single fused store


def mlp_forward(x, w0, w1, w2, prelu_a):
    """x: (N, 1) float32. Returns (N, 1) float32 == fc2(PReLU(fc1(PReLU(fc0(x)))))."""
    orig_shape = x.shape
    n = x.size

    # Scalars for the SMEM path: [prelu slope, w0, w1, w2].
    scal = jnp.concatenate([
        jnp.asarray([prelu_a], dtype=jnp.float32),
        jnp.asarray(w0, dtype=jnp.float32).reshape(-1),
        jnp.asarray(w1, dtype=jnp.float32).reshape(-1),
        jnp.asarray(w2, dtype=jnp.float32).reshape(-1),
    ])

    # Lane-dense layout: flatten, pad to a multiple of 8*128, reshape to (rows, 128).
    flat = x.reshape(-1).astype(jnp.float32)
    padded = pl.cdiv(n, 8 * _LANES) * (8 * _LANES)
    if padded != n:
        flat = jnp.pad(flat, (0, padded - n))
    rows = padded // _LANES
    x2d = flat.reshape(rows, _LANES)

    # Biggest tile that fits (full array for small inputs, 1024-row tiles otherwise).
    tm = min(_BLOCK_ROWS, rows)
    grid = (pl.cdiv(rows, tm),)

    out2d = pl.pallas_call(
        mlp_kernel,
        out_shape=jax.ShapeDtypeStruct((rows, _LANES), jnp.float32),
        grid=grid,
        in_specs=[
            pl.BlockSpec(memory_space=pltpu.MemorySpace.SMEM),   # [a, w0, w1, w2]
            pl.BlockSpec((tm, _LANES), lambda i: (i, 0)),        # x tile
        ],
        out_specs=pl.BlockSpec((tm, _LANES), lambda i: (i, 0)),
        compiler_params=pltpu.CompilerParams(
            dimension_semantics=("parallel",)),                  # megacore-shardable
    )(scal, x2d)

    # Drop padding and restore the (N, 1) shape.
    return out2d.reshape(-1)[:n].reshape(orig_shape)


def mlp_reference(x, w0, w1, w2, prelu_a):
    z0 = x @ w0.T
    g0 = _prelu(z0, prelu_a)
    z1 = g0 @ w1.T
    g1 = _prelu(z1, prelu_a)
    return g1 @ w2.T


if __name__ == "__main__":
    w0 = jnp.asarray(W0, dtype=jnp.float32)   # fc0.weight (1, 1)
    w1 = jnp.asarray(W1, dtype=jnp.float32)   # fc1.weight (1, 1)
    w2 = jnp.asarray(W2, dtype=jnp.float32)   # fc2.weight (1, 1)

    # Small case matching the module: batch of 8 scalar samples.
    batch = 8
    x = jax.random.normal(jax.random.PRNGKey(0), (batch, 1), dtype=jnp.float32)
    y = mlp_forward(x, w0, w1, w2, PRELU_A)
    jax.block_until_ready(y)
    y_ref = mlp_reference(x, w0, w1, w2, PRELU_A)
    assert y.shape == (batch, 1)
    assert jnp.allclose(y, y_ref, atol=1e-6, rtol=1e-6)

    # Non-aligned, multi-block case: exercises padding, partial last block, and a
    # multi-step parallel grid (both TCs on v7x get work).
    n2 = 3 * _BLOCK_ROWS * _LANES // 2 + 37
    x2 = jax.random.normal(jax.random.PRNGKey(1), (n2, 1), dtype=jnp.float32)
    y2 = mlp_forward(x2, w0, w1, w2, PRELU_A)
    jax.block_until_ready(y2)
    y2_ref = mlp_reference(x2, w0, w1, w2, PRELU_A)
    assert y2.shape == (n2, 1)
    assert jnp.allclose(y2, y2_ref, atol=1e-6, rtol=1e-6)

    print("KERNEL_OK")
</pallas_src>

<mosaic_0001>
module attributes {stable_mosaic.version = 11 : i64} {
  func.func @mlp_kernel(%arg0: i32, %arg1: memref<4xf32, #tpu.memory_space<smem>>, %arg2: memref<8x128xf32, #tpu.memory_space<vmem>>, %arg3: memref<8x128xf32, #tpu.memory_space<vmem>>) attributes {dimension_semantics = [#tpu.dimension_semantics<parallel>], iteration_bounds = array<i64: 1>, scalar_prefetch = 0 : i64, scratch_operands = 0 : i64, tpu.core_type = #tpu.core_type<tc>, window_params = [{transform_indices = @transform_0, window_bounds = array<i64: 4>}, {transform_indices = @transform_1, window_bounds = array<i64: 8, 128>}, {transform_indices = @transform_2, window_bounds = array<i64: 8, 128>}]} {
    %c0 = arith.constant 0 : index
    %0 = memref.load %arg1[%c0] : memref<4xf32, #tpu.memory_space<smem>>
    %c1 = arith.constant 1 : index
    %1 = memref.load %arg1[%c1] : memref<4xf32, #tpu.memory_space<smem>>
    %c2 = arith.constant 2 : index
    %2 = memref.load %arg1[%c2] : memref<4xf32, #tpu.memory_space<smem>>
    %c3 = arith.constant 3 : index
    %3 = memref.load %arg1[%c3] : memref<4xf32, #tpu.memory_space<smem>>
    %c0_0 = arith.constant 0 : index
    %c0_1 = arith.constant 0 : index
    %4 = vector.load %arg2[%c0_0, %c0_1] : memref<8x128xf32, #tpu.memory_space<vmem>>, vector<8x128xf32>
    %5 = vector.broadcast %1 : f32 to vector<8x128xf32>
    %6 = arith.mulf %5, %4 : vector<8x128xf32>
    %cst = arith.constant 0.000000e+00 : f32
    %7 = vector.broadcast %cst : f32 to vector<8x128xf32>
    %8 = arith.cmpf ogt, %6, %7 : vector<8x128xf32>
    %9 = vector.broadcast %0 : f32 to vector<8x128xf32>
    %10 = arith.mulf %9, %6 : vector<8x128xf32>
    %11 = arith.select %8, %6, %10 : vector<8x128xi1>, vector<8x128xf32>
    %12 = vector.broadcast %2 : f32 to vector<8x128xf32>
    %13 = arith.mulf %12, %11 : vector<8x128xf32>
    %cst_2 = arith.constant 0.000000e+00 : f32
    %14 = vector.broadcast %cst_2 : f32 to vector<8x128xf32>
    %15 = arith.cmpf ogt, %13, %14 : vector<8x128xf32>
    %16 = vector.broadcast %0 : f32 to vector<8x128xf32>
    %17 = arith.mulf %16, %13 : vector<8x128xf32>
    %18 = arith.select %15, %13, %17 : vector<8x128xi1>, vector<8x128xf32>
    %19 = vector.broadcast %3 : f32 to vector<8x128xf32>
    %20 = arith.mulf %19, %18 : vector<8x128xf32>
    %c0_3 = arith.constant 0 : index
    %c0_4 = arith.constant 0 : index
    %21 = vector.load %arg3[%c0_3, %c0_4] : memref<8x128xf32, #tpu.memory_space<vmem>>, vector<8x128xf32>
    tpu.vector_store %arg3[%c0_3, %c0_4], %20 {strides = array<i32>} : memref<8x128xf32, #tpu.memory_space<vmem>>, vector<8x128xf32>,
    return
  }
  func.func @transform_0(%arg0: i32) -> i32 {
    %c0_i32 = arith.constant 0 : i32
    %c0_i32_0 = arith.constant 0 : i32
    return %c0_i32 : i32
  }
  func.func @transform_1(%arg0: i32) -> (i32, i32) {
    %c0_i32 = arith.constant 0 : i32
    %c0_i32_0 = arith.constant 0 : i32
    return %arg0, %c0_i32 : i32, i32
  }
  func.func @transform_2(%arg0: i32) -> (i32, i32) {
    %c0_i32 = arith.constant 0 : i32
    %c0_i32_0 = arith.constant 0 : i32
    return %arg0, %c0_i32 : i32, i32
  }
}

</mosaic_0001>

<llo_original>
// kernel: tpu_custom_call.1
$region0: #{tpu_custom_call.1}
  #allocation0 [shape = 'u32[]', space=smem, size = 0x4, offset = 0x4, fixed_abs, tag = 'smem constant byte address 0x4 - core index']
  #allocation1 [shape = 'u32[144,128]{1,0:T(1,128)}', space=vmem, size = 0x12000, scoped, tag = 'internal scratch']
  %s0 = inlined_call_operand.hbm [shape: f32[4], index: 0, kind: input, shape index: {}]
  %s1 = inlined_call_operand.hbm [shape: f32[8,128], index: 1, kind: input, shape index: {}]
  %s2 = inlined_call_operand.hbm [shape: f32[8,128], index: 2, kind: output, shape index: {}]
  %s3 = sld [smem:[#allocation0]]
  $region26: #{tpu_custom_call.1} parent=0
    _
  %s5 = ssub.s32 1, %s3
  %s6 = scalar_select 0, %s5, %s3
  $region1: #{tpu_custom_call.1} parent=0
    #allocation2 [shape = 'u8[512]{0}', space=smem, size = 0x200, scoped, tag = 'input window, operand 0, single buffered']
    #allocation3 [shape = 's32[1]{0}', space=sflag, size = 0x4, scoped, tag = 'scoped memory for tpu_custom_call.1']
    #allocation4 [shape = 's32[1]{0}', space=sflag, size = 0x4, scoped, tag = 'scoped memory for tpu_custom_call.1']
    #allocation5 [shape = 's32[1]{0}', space=sflag, size = 0x4, scoped, tag = 'scoped memory for tpu_custom_call.1']
    #allocation6 [shape = 'u8[4096]{0}', space=vmem, size = 0x1000, scoped, tag = 'input window, operand 1, single buffered']
    #allocation7 [shape = 'u8[4096]{0}', space=vmem, size = 0x1000, scoped, tag = 'output window, operand 0, single buffered']
    %7 = vsyncpa [#allocation5], 0
    %8 = vsyncpa [#allocation3], 0
    %9 = vsyncpa [#allocation4], 0
    // Predicated region
    $region2: #{tpu_custom_call.1} parent=1 // pred_check
      _
    $region3: #{tpu_custom_call.1} parent=1 // pred_check_branch
      %11 = sbr.rel (0) target = $region5
    $region4: #{tpu_custom_call.1} parent=1 // pred_region
      %s13 = ssub.s32 16, 16
      %14 = vsyncadd [#allocation5], %s13
      %17 = dma.hbm_to_smem %s0, 16, [#allocation2], [#allocation5]
    $region5: #{tpu_custom_call.1} parent=1 // pred_fallthru
      _
    // Predicated region
    $region6: #{tpu_custom_call.1} parent=1 // pred_check
      _
    $region7: #{tpu_custom_call.1} parent=1 // pred_check_branch
      %19 = sbr.rel (0) target = $region9
    $region8: #{tpu_custom_call.1} parent=1 // pred_region
      %s21 = ssub.s32 128, 128
      %22 = vsyncadd [#allocation3], %s21
      %s24 = sshll.u32 [#allocation6], 4
      %s25 = int_to_ptr.vmem [resolvable:$true] %s24
      %27 = dma.hbm_to_vmem [thread:$0]  %s1, 128, %s25, [#allocation3]
    $region9: #{tpu_custom_call.1} parent=1 // pred_fallthru
      _
    // Predicated region
    $region10: #{tpu_custom_call.1} parent=1 // pred_check
      _
    $region11: #{tpu_custom_call.1} parent=1 // pred_check_branch
      %29 = sbr.rel (0) target = $region13
    $region12: #{tpu_custom_call.1} parent=1 // pred_region
      %30 = dma.done [#allocation5], 16
    $region13: #{tpu_custom_call.1} parent=1 // pred_fallthru
      _
    // Predicated region
    $region14: #{tpu_custom_call.1} parent=1 // pred_check
      _
    $region15: #{tpu_custom_call.1} parent=1 // pred_check_branch
      %32 = sbr.rel (0) target = $region17
    $region16: #{tpu_custom_call.1} parent=1 // pred_region
      %33 = dma.done [#allocation3], 128
    $region17: #{tpu_custom_call.1} parent=1 // pred_fallthru
      _
    %34 = sfence
    %s35 = sld [smem:[#allocation2]]
    %s36 = sld [smem:[#allocation2 + $0x1]]
    %s37 = sld [smem:[#allocation2 + $0x2]]
    %s38 = sld [smem:[#allocation2 + $0x3]]
    %v39 = vld [vmem:[#allocation6] sm:$0xff]
    %v40 = vstv %s36
    %v41 = vmul.f32 %v40, %v39
    %vm42 = vcmp.gt.f32.partialorder %v41, 0.0
    %v43 = vstv %s35
    %v44 = vmul.f32 %v43, %v41
    %v45 = vsel %vm42, %v41, %v44
    %v46 = vstv %s37
    %v47 = vmul.f32 %v46, %v45
    %vm48 = vcmp.gt.f32.partialorder %v47, 0.0
    %v49 = vmul.f32 %v43, %v47
    %v50 = vsel %vm48, %v47, %v49
    %v51 = vstv %s38
    %v52 = vmul.f32 %v51, %v50
    %53 = vst [vmem:[#allocation7] sm:$0xff] %v52
    // Predicated region
    $region18: #{tpu_custom_call.1} parent=1 // pred_check
      _
    $region19: #{tpu_custom_call.1} parent=1 // pred_check_branch
      %55 = sbr.rel (0) target = $region21
    $region20: #{tpu_custom_call.1} parent=1 // pred_region
      %s57 = ssub.s32 128, 128
      %58 = vsyncadd [#allocation4], %s57
      %s60 = sshll.u32 [#allocation7], 4
      %s61 = int_to_ptr.vmem [resolvable:$true] %s60
      %63 = dma.vmem_to_hbm [thread:$0]  %s61, 128, %s2, [#allocation4]
    $region21: #{tpu_custom_call.1} parent=1 // pred_fallthru
      _
    // Predicated region
    $region22: #{tpu_custom_call.1} parent=1 // pred_check
      _
    $region23: #{tpu_custom_call.1} parent=1 // pred_check_branch
      %65 = sbr.rel (0) target = $region25
    $region24: #{tpu_custom_call.1} parent=1 // pred_region
      %66 = dma.done [#allocation4], 128
    $region25: #{tpu_custom_call.1} parent=1 // pred_fallthru
      _
    %67 = vsyncpa [#allocation3], 1
    %68 = vsyncpa [#allocation4], 1
    %69 = vsyncpa [#allocation5], 1

</llo_original>
